<compile_context>
chip_gen: v7x
topology: tpu7x:2x2x1
jax: 0.10.0
libtpu: 0.0.40
codegen_flags: <defaults>
</compile_context>

<pallas_src>
from functools import partial

import jax
import jax.numpy as jnp
from jax.experimental import pallas as pl
from jax.experimental.pallas import tpu as pltpu


# --------------------------------------------------------------------------------------
# Kernel
# --------------------------------------------------------------------------------------
def temporal_attention_kernel(x_ref, mask_ref, w1_ref, b1_ref, w2_ref,
                              ctx_ref, attn_ref, *, score_dtype=None):
    Bb, T, H = x_ref.shape
    A = w1_ref.shape[1]

    x = x_ref[...]                                      # (Bb, T, H) native dtype
    mask = mask_ref[...]                                # (Bb, T) int32

    mm_dtype = x.dtype if score_dtype is None else score_dtype
    w1 = w1_ref[...].astype(mm_dtype)                   # (H, A) fed to MXU in matmul dtype
    b1 = b1_ref[...].astype(jnp.float32)                # (1, A)
    w2 = w2_ref[...].astype(jnp.float32)                # (1, A) (pre-transposed row of Linear2)

    # --- Linear1: one large-M MXU matmul (batch collapsed into M); f32 accumulation. ---
    # T is sublane-aligned by the wrapper, so this reshape is layout-preserving.
    x2d = x.reshape(Bb * T, H).astype(mm_dtype)
    h = jnp.tanh(jnp.dot(x2d, w1, preferred_element_type=jnp.float32) + b1)   # (Bb*T, A) f32

    # --- Linear2 (out_features=1, no bias): VPU multiply + lane reduce, no N=1 matmul. ---
    scores = jnp.sum(h * w2, axis=-1, keepdims=True).reshape(Bb, T, 1)        # (Bb, T, 1) f32

    # --- masked_fill(mask == 0, -1e9) ---
    scores = jnp.where(mask.reshape(Bb, T, 1) == 0, jnp.float32(-1e9), scores)

    # --- softmax over T (sublane reduce). Exact divide: weights sum to 1 (review fix). ---
    m = jnp.max(scores, axis=1, keepdims=True)                                # (Bb, 1, 1)
    e = jnp.exp(scores - m)                                                   # (Bb, T, 1)
    weights = e / jnp.sum(e, axis=1, keepdims=True)                           # (Bb, T, 1) f32

    # --- context = sum_t x * w ; weights broadcast over H (lanes) for free. ---
    if x.dtype == jnp.bfloat16:
        # bf16 multiply on the VPU (v6e/v7x), f32 accumulation -> no f32 copy of the x tile.
        prod = x * weights.astype(jnp.bfloat16)
        ctx = jnp.sum(prod, axis=1, dtype=jnp.float32)                        # (Bb, H) f32
    else:
        ctx = jnp.sum(x * weights, axis=1)                                    # (Bb, H) f32

    ctx_ref[...] = ctx.astype(ctx_ref.dtype)
    # (Bb, T) store; sublane->lane relayout + (T<128) masked store, both tiny vs x traffic.
    attn_ref[...] = weights[..., 0].astype(attn_ref.dtype)


# --------------------------------------------------------------------------------------
# VMEM accounting / tile selection
# --------------------------------------------------------------------------------------
def _round_up(n, m):
    return ((n + m - 1) // m) * m


def _sublane_pack(dtype):
    # 8 for 32-bit, 16 for 16-bit, 32 for 8-bit element types.
    return max(8, 32 // jnp.dtype(dtype).itemsize)


def _footprint_bytes(Bb, T, H, A, x_dtype):
    """Per-grid-step VMEM bytes: double-buffered (lane/sublane padded) operand/result tiles,
    VMEM-resident params, and the in-kernel f32 working set."""
    it = jnp.dtype(x_dtype).itemsize
    sub = _sublane_pack(x_dtype)
    f32 = 4
    Hp, Ap = _round_up(H, 128), _round_up(A, 128)
    Tp = _round_up(T, sub)

    # Pipelined (double-buffered) tiles.
    x_tile = Bb * Tp * Hp * it
    mask_tile = _round_up(Bb, 8) * _round_up(T, 128) * 4
    ctx_tile = _round_up(Bb, sub) * Hp * it
    attn_tile = _round_up(Bb, 8) * _round_up(T, 128) * f32
    buffered = 2 * (x_tile + mask_tile + ctx_tile + attn_tile)

    # VMEM-resident parameters (also double-buffered by the pipeline, but tiny).
    w1_b = _round_up(H, sub) * Ap * it
    b1_b = 8 * Ap * f32
    w2_b = 8 * Ap * f32
    params = 2 * (w1_b + b1_b + w2_b)

    # In-kernel f32 working set (single-buffered).
    h_act = _round_up(Bb * Tp, 8) * Ap * f32                 # tanh activations
    small_bt = 4 * Bb * _round_up(T, 8) * 128 * f32          # scores / e / weights (lane-padded to 128)
    ctx_work = Bb * Tp * Hp * f32                            # product tile for the context sum
    work = h_act + small_bt + ctx_work

    return buffered + params + work


def _vmem_budget_bytes():
    """Usable per-core VMEM budget (leave headroom for Mosaic internal scratch).
    Falls back to a v7x-safe 64 MiB capacity if the hardware query fails."""
    cap = 64 << 20
    try:
        info = pltpu.get_tpu_info()
        c = int(getattr(info, "vmem_capacity_bytes", 0) or 0)
        if c > 0:
            cap = c
    except Exception:
        pass
    # ~60% of physical: v5e/v6e (128 MiB) -> ~76 MiB, v7x (64 MiB) -> ~38 MiB.
    return min(int(cap * 0.6), 96 << 20)


def _choose_block_b(B, T, H, A, x_dtype, budget):
    # Megacore: guarantee >=2 (ideally >=4) grid steps when the batch is big enough, so
    # dimension_semantics=("parallel",) can shard batch tiles across v7x's 2 TensorCores.
    if B >= 32:
        cap = _round_up(pl.cdiv(B, 4), 8)
    elif B >= 16:
        cap = _round_up(pl.cdiv(B, 2), 8)
    else:
        cap = B
    bb = min(B, cap)
    # Shrink (sublane-friendly) until the modeled footprint fits the budget.
    while bb > 8 and _footprint_bytes(bb, T, H, A, x_dtype) > budget:
        nxt = max(8, (bb // 2 // 8) * 8)
        if nxt == bb:
            break
        bb = nxt
    if bb < B:
        bb = max(8, (bb // 8) * 8)
    return min(bb, B)


# --------------------------------------------------------------------------------------
# Wrapper
# --------------------------------------------------------------------------------------
def temporal_attention(x, mask, w1, b1, w2, *, block_b=None, score_dtype=None,
                       vmem_limit_bytes=None):
    """x: (B, T, H); mask: (B, T); w1: (H, A); b1: (1, A); w2: (A, 1).
    Returns (context (B, H) in x.dtype, attention_weights (B, T) f32)."""
    B, T, H = x.shape
    A = w1.shape[1]
    itemsize = jnp.dtype(x.dtype).itemsize
    sub = _sublane_pack(x.dtype)

    # Sublane-align T so in-kernel reshapes are layout-preserving (no per-step relayout of x).
    # Padded steps get mask=0 -> exactly zero attention weight, so results are unchanged
    # (except the degenerate all-zero-mask row, which is already an ill-defined case upstream).
    Tp = _round_up(T, sub)
    if Tp != T:
        x = jnp.pad(x, ((0, 0), (0, Tp - T), (0, 0)))
        mask = jnp.pad(mask, ((0, 0), (0, Tp - T)))
    mask = mask.astype(jnp.int32)
    w2_row = w2.reshape(1, A)   # avoid an in-kernel (A,1)->(1,A) lane relayout

    budget = _vmem_budget_bytes()
    if block_b is None:
        block_b = _choose_block_b(B, Tp, H, A, x.dtype, budget)
    block_b = min(block_b, B)
    grid = (pl.cdiv(B, block_b),)

    footprint = _footprint_bytes(block_b, Tp, H, A, x.dtype)
    if vmem_limit_bytes is None:
        # Explicit scoped-VMEM limit from the modeled footprint (floor 32 MiB, cap at budget).
        vmem_limit_bytes = int(min(budget, max(2 * footprint + (4 << 20), 32 << 20)))

    cost = pl.CostEstimate(
        flops=2 * B * Tp * H * A + 2 * B * Tp * A + 2 * B * Tp * H,
        transcendentals=B * Tp * A + B * Tp,          # tanh + exp
        bytes_accessed=(B * Tp * H + B * H) * itemsize + 2 * B * Tp * 4 + (H * A + 2 * A) * 4,
    )

    kernel = partial(temporal_attention_kernel, score_dtype=score_dtype)
    ctx, attn = pl.pallas_call(
        kernel,
        out_shape=(
            jax.ShapeDtypeStruct((B, H), x.dtype),     # context_vector
            jax.ShapeDtypeStruct((B, Tp), jnp.float32),  # attention_weights (f32)
        ),
        grid=grid,
        in_specs=[
            pl.BlockSpec((block_b, Tp, H), lambda i: (i, 0, 0)),   # x: tiled over batch
            pl.BlockSpec((block_b, Tp), lambda i: (i, 0)),         # mask
            pl.BlockSpec((H, A), lambda i: (0, 0)),                # w1: VMEM-resident
            pl.BlockSpec((1, A), lambda i: (0, 0)),                # b1: VMEM-resident
            pl.BlockSpec((1, A), lambda i: (0, 0)),                # w2 row: VMEM-resident
        ],
        out_specs=(
            pl.BlockSpec((block_b, H), lambda i: (i, 0)),
            pl.BlockSpec((block_b, Tp), lambda i: (i, 0)),
        ),
        compiler_params=pltpu.CompilerParams(
            dimension_semantics=("parallel",),         # batch tiles shard across v7x's 2 TCs
            vmem_limit_bytes=vmem_limit_bytes,
        ),
        cost_estimate=cost,
    )(x, mask, w1, b1, w2_row)

    if Tp != T:
        attn = attn[:, :T]
    return ctx, attn


def temporal_attention_ref(x, mask, w1, b1, w2):
    """Pure-JAX reference matching the PyTorch forward."""
    scores = jnp.tanh(x @ w1 + b1[0]) @ w2            # (B, T, 1)
    scores = scores[..., 0]                           # (B, T)
    scores = jnp.where(mask == 0, -1e9, scores)
    weights = jax.nn.softmax(scores, axis=1)
    ctx = jnp.sum(x * weights[:, :, None], axis=1)
    return ctx, weights


if __name__ == "__main__":
    B, T, H, A = 2, 8, 32, 64  # batch, seq_len, hidden (feature_dim), attention hidden
    key = jax.random.PRNGKey(0)
    k_x, k_w1, k_b1, k_w2 = jax.random.split(key, 4)

    # lstm_output: (B, T, H)
    x = jax.random.normal(k_x, (B, T, H), dtype=jnp.float32)
    # mask: (B, T) — last few steps of batch element 1 are padding
    mask = jnp.ones((B, T), dtype=jnp.int32).at[1, T - 3:].set(0)

    # Deterministic param init (same scaling style as torch.nn.Linear default).
    lim1 = 1.0 / (H ** 0.5)
    w1 = jax.random.uniform(k_w1, (H, A), jnp.float32, -lim1, lim1)
    b1 = jax.random.uniform(k_b1, (1, A), jnp.float32, -lim1, lim1)
    lim2 = 1.0 / (A ** 0.5)
    w2 = jax.random.uniform(k_w2, (A, 1), jnp.float32, -lim2, lim2)

    ctx, attn = temporal_attention(x, mask, w1, b1, w2)
    jax.block_until_ready((ctx, attn))

    ctx_r, attn_r = temporal_attention_ref(x, mask, w1, b1, w2)
    # Exact softmax divide -> tight tolerances.
    assert jnp.allclose(ctx, ctx_r, atol=1e-5, rtol=1e-5), float(jnp.max(jnp.abs(ctx - ctx_r)))
    assert jnp.allclose(attn, attn_r, atol=1e-5, rtol=1e-5)
    # padded steps must receive zero weight; weights sum to 1
    assert float(jnp.max(attn[1, T - 3:])) < 1e-6
    assert jnp.allclose(jnp.sum(attn, axis=1), 1.0, atol=1e-5)

    print("KERNEL_OK")
</pallas_src>

<mosaic_0001>
module attributes {stable_mosaic.version = 11 : i64} {
  func.func @temporal_attention_kernel(%arg0: i32, %arg1: memref<2x8x32xf32, #tpu.memory_space<vmem>>, %arg2: memref<2x8xi32, #tpu.memory_space<vmem>>, %arg3: memref<32x64xf32, #tpu.memory_space<vmem>>, %arg4: memref<1x64xf32, #tpu.memory_space<vmem>>, %arg5: memref<1x64xf32, #tpu.memory_space<vmem>>, %arg6: memref<2x32xf32, #tpu.memory_space<vmem>>, %arg7: memref<2x8xf32, #tpu.memory_space<vmem>>) attributes {dimension_semantics = [#tpu.dimension_semantics<parallel>], iteration_bounds = array<i64: 1>, scalar_prefetch = 0 : i64, scratch_operands = 0 : i64, tpu.core_type = #tpu.core_type<tc>, window_params = [{transform_indices = @transform_0, window_bounds = array<i64: 2, 8, 32>}, {transform_indices = @transform_1, window_bounds = array<i64: 2, 8>}, {pipeline_mode = #tpu.pipeline_mode<synchronous>, transform_indices = @transform_2, window_bounds = array<i64: 32, 64>}, {pipeline_mode = #tpu.pipeline_mode<synchronous>, transform_indices = @transform_3, window_bounds = array<i64: 1, 64>}, {pipeline_mode = #tpu.pipeline_mode<synchronous>, transform_indices = @transform_4, window_bounds = array<i64: 1, 64>}, {transform_indices = @transform_5, window_bounds = array<i64: 2, 32>}, {transform_indices = @transform_6, window_bounds = array<i64: 2, 8>}]} {
    %c0 = arith.constant 0 : index
    %c0_0 = arith.constant 0 : index
    %c0_1 = arith.constant 0 : index
    %0 = vector.load %arg1[%c0, %c0_0, %c0_1] : memref<2x8x32xf32, #tpu.memory_space<vmem>>, vector<2x8x32xf32>
    %c0_2 = arith.constant 0 : index
    %c0_3 = arith.constant 0 : index
    %1 = vector.load %arg2[%c0_2, %c0_3] : memref<2x8xi32, #tpu.memory_space<vmem>>, vector<2x8xi32>
    %c0_4 = arith.constant 0 : index
    %c0_5 = arith.constant 0 : index
    %2 = vector.load %arg3[%c0_4, %c0_5] : memref<32x64xf32, #tpu.memory_space<vmem>>, vector<32x64xf32>
    %c0_6 = arith.constant 0 : index
    %c0_7 = arith.constant 0 : index
    %3 = vector.load %arg4[%c0_6, %c0_7] : memref<1x64xf32, #tpu.memory_space<vmem>>, vector<1x64xf32>
    %c0_8 = arith.constant 0 : index
    %c0_9 = arith.constant 0 : index
    %4 = vector.load %arg5[%c0_8, %c0_9] : memref<1x64xf32, #tpu.memory_space<vmem>>, vector<1x64xf32>
    %5 = vector.shape_cast %0 : vector<2x8x32xf32> to vector<16x32xf32>
    %cst = arith.constant dense<0.000000e+00> : vector<16x64xf32>
    %6 = tpu.matmul %5, %2, %cst {dimension_numbers = #tpu.dot_dimension_numbers<[1], [0], [0], [1], [0, 0, 1, 1], [], []>} : vector<16x32xf32>, vector<32x64xf32>, vector<16x64xf32> -> vector<16x64xf32>
    %7 = vector.broadcast %3 : vector<1x64xf32> to vector<16x64xf32>
    %8 = arith.addf %6, %7 : vector<16x64xf32>
    %9 = math.tanh %8 : vector<16x64xf32>
    %10 = vector.broadcast %4 : vector<1x64xf32> to vector<16x64xf32>
    %11 = arith.mulf %9, %10 : vector<16x64xf32>
    %cst_10 = arith.constant dense<0.000000e+00> : vector<16xf32>
    %12 = vector.multi_reduction <add>, %11, %cst_10 [1] : vector<16x64xf32> to vector<16xf32>
    %13 = vector.shape_cast %12 : vector<16xf32> to vector<16x1xf32>
    %14 = vector.shape_cast %13 : vector<16x1xf32> to vector<2x8x1xf32>
    %15 = vector.shape_cast %1 : vector<2x8xi32> to vector<2x8x1xi32>
    %c0_i32 = arith.constant 0 : i32
    %16 = vector.broadcast %c0_i32 : i32 to vector<2x8x1xi32>
    %17 = arith.cmpi eq, %15, %16 : vector<2x8x1xi32>
    %cst_11 = arith.constant -1.000000e+09 : f32
    %18 = vector.broadcast %cst_11 : f32 to vector<2x8x1xf32>
    %19 = arith.select %17, %18, %14 : vector<2x8x1xi1>, vector<2x8x1xf32>
    %cst_12 = arith.constant dense<0xFF800000> : vector<2x1xf32>
    %20 = vector.multi_reduction <maximumf>, %19, %cst_12 [1] : vector<2x8x1xf32> to vector<2x1xf32>
    %21 = vector.shape_cast %20 : vector<2x1xf32> to vector<2x1x1xf32>
    %22 = vector.broadcast %21 : vector<2x1x1xf32> to vector<2x8x1xf32>
    %23 = arith.subf %19, %22 : vector<2x8x1xf32>
    %24 = math.exp %23 : vector<2x8x1xf32>
    %cst_13 = arith.constant dense<0.000000e+00> : vector<2x1xf32>
    %25 = vector.multi_reduction <add>, %24, %cst_13 [1] : vector<2x8x1xf32> to vector<2x1xf32>
    %26 = vector.shape_cast %25 : vector<2x1xf32> to vector<2x1x1xf32>
    %27 = vector.broadcast %26 : vector<2x1x1xf32> to vector<2x8x1xf32>
    %28 = arith.divf %24, %27 : vector<2x8x1xf32>
    %29 = vector.broadcast %28 : vector<2x8x1xf32> to vector<2x8x32xf32>
    %30 = arith.mulf %0, %29 : vector<2x8x32xf32>
    %cst_14 = arith.constant dense<0.000000e+00> : vector<2x32xf32>
    %31 = vector.multi_reduction <add>, %30, %cst_14 [1] : vector<2x8x32xf32> to vector<2x32xf32>
    %c0_15 = arith.constant 0 : index
    %c0_16 = arith.constant 0 : index
    %32 = vector.load %arg6[%c0_15, %c0_16] : memref<2x32xf32, #tpu.memory_space<vmem>>, vector<2x32xf32>
    tpu.vector_store %arg6[%c0_15, %c0_16], %31 {strides = array<i32>} : memref<2x32xf32, #tpu.memory_space<vmem>>, vector<2x32xf32>,
    %33 = vector.shape_cast %28 : vector<2x8x1xf32> to vector<2x8xf32>
    %c0_17 = arith.constant 0 : index
    %c0_18 = arith.constant 0 : index
    %34 = vector.load %arg7[%c0_17, %c0_18] : memref<2x8xf32, #tpu.memory_space<vmem>>, vector<2x8xf32>
    tpu.vector_store %arg7[%c0_17, %c0_18], %33 {strides = array<i32>} : memref<2x8xf32, #tpu.memory_space<vmem>>, vector<2x8xf32>,
    return
  }
  func.func @transform_0(%arg0: i32) -> (i32, i32, i32) {
    %c0_i32 = arith.constant 0 : i32
    %c0_i32_0 = arith.constant 0 : i32
    %c0_i32_1 = arith.constant 0 : i32
    return %arg0, %c0_i32, %c0_i32_0 : i32, i32, i32
  }
  func.func @transform_1(%arg0: i32) -> (i32, i32) {
    %c0_i32 = arith.constant 0 : i32
    %c0_i32_0 = arith.constant 0 : i32
    return %arg0, %c0_i32 : i32, i32
  }
  func.func @transform_2(%arg0: i32) -> (i32, i32) {
    %c0_i32 = arith.constant 0 : i32
    %c0_i32_0 = arith.constant 0 : i32
    %c0_i32_1 = arith.constant 0 : i32
    return %c0_i32, %c0_i32_0 : i32, i32
  }
  func.func @transform_3(%arg0: i32) -> (i32, i32) {
    %c0_i32 = arith.constant 0 : i32
    %c0_i32_0 = arith.constant 0 : i32
    %c0_i32_1 = arith.constant 0 : i32
    return %c0_i32, %c0_i32_0 : i32, i32
  }
  func.func @transform_4(%arg0: i32) -> (i32, i32) {
    %c0_i32 = arith.constant 0 : i32
    %c0_i32_0 = arith.constant 0 : i32
    %c0_i32_1 = arith.constant 0 : i32
    return %c0_i32, %c0_i32_0 : i32, i32
  }
  func.func @transform_5(%arg0: i32) -> (i32, i32) {
    %c0_i32 = arith.constant 0 : i32
    %c0_i32_0 = arith.constant 0 : i32
    return %arg0, %c0_i32 : i32, i32
  }
  func.func @transform_6(%arg0: i32) -> (i32, i32) {
    %c0_i32 = arith.constant 0 : i32
    %c0_i32_0 = arith.constant 0 : i32
    return %arg0, %c0_i32 : i32, i32
  }
}

</mosaic_0001>

<llo_original>
// kernel: tpu_custom_call.1
$region0: #{tpu_custom_call.1}
  #allocation0 [shape = 'u32[]', space=smem, size = 0x4, offset = 0x4, fixed_abs, tag = 'smem constant byte address 0x4 - core index']
  #allocation1 [shape = 'u32[144,128]{1,0:T(1,128)}', space=vmem, size = 0x12000, scoped, tag = 'internal scratch']
  %s0 = inlined_call_operand.hbm [shape: f32[2,8,32], index: 0, kind: input, shape index: {}]
  %s1 = inlined_call_operand.vmem [shape: s32[2,8], index: 1, kind: input, shape index: {}]
  %s2 = inlined_call_operand.hbm [shape: f32[32,64], index: 2, kind: input, shape index: {}]
  %s3 = inlined_call_operand.vmem [shape: f32[1,64], index: 3, kind: input, shape index: {}]
  %s4 = inlined_call_operand.vmem [shape: f32[1,64], index: 4, kind: input, shape index: {}]
  %s5 = inlined_call_operand.hbm [shape: f32[2,32], index: 5, kind: output, shape index: {0}]
  %s6 = inlined_call_operand.hbm [shape: f32[2,8], index: 6, kind: output, shape index: {1}]
  %7 = xla_tuple %s5, %s6
  %s8 = sld [smem:[#allocation0]]
  $region46: #{tpu_custom_call.1} parent=0
    _
  %s10 = ssub.s32 1, %s8
  %s11 = scalar_select 0, %s10, %s8
  $region1: #{tpu_custom_call.1} parent=0
    #allocation2 [shape = 'u8[8192]{0}', space=vmem, size = 0x2000, scoped, tag = 'input window, operand 0, single buffered']
    #allocation3 [shape = 's32[1]{0}', space=sflag, size = 0x4, scoped, tag = 'scoped memory for tpu_custom_call.1']
    #allocation4 [shape = 's32[1]{0}', space=sflag, size = 0x4, scoped, tag = 'scoped memory for tpu_custom_call.1']
    #allocation5 [shape = 'u8[16384]{0}', space=vmem, size = 0x4000, scoped, tag = 'input window, operand 2, single buffered']
    #allocation6 [shape = 's32[1]{0}', space=sflag, size = 0x4, scoped, tag = 'scoped memory for tpu_custom_call.1']
    #allocation7 [shape = 'u8[1024]{0}', space=vmem, size = 0x400, scoped, tag = 'output window, operand 0, single buffered']
    #allocation8 [shape = 'u8[1024]{0}', space=vmem, size = 0x400, scoped, tag = 'output window, operand 1, single buffered']
    #allocation9 [shape = 's32[1]{0}', space=sflag, size = 0x4, scoped, tag = 'scoped memory for tpu_custom_call.1']
    %12 = vsyncpa [#allocation3], 0
    %13 = vsyncpa [#allocation6], 0
    %14 = vsyncpa [#allocation4], 0
    %15 = vsyncpa [#allocation9], 0
    // Predicated region
    $region2: #{tpu_custom_call.1} parent=1 // pred_check
      _
    $region3: #{tpu_custom_call.1} parent=1 // pred_check_branch
      %17 = sbr.rel (0) target = $region5
    $region4: #{tpu_custom_call.1} parent=1 // pred_region
      %s19 = ssub.s32 256, 256
      %20 = vsyncadd [#allocation3], %s19
      %s21 = sshll.u32 [#allocation2], 4
      %s22 = int_to_ptr.vmem [resolvable:$true] %s21
      %27 = dma.hbm_to_vmem [thread:$0]  %s0, 256, %s22, [#allocation3], 128, 128, 8
    $region5: #{tpu_custom_call.1} parent=1 // pred_fallthru
      _
    // Predicated region
    $region6: #{tpu_custom_call.1} parent=1 // pred_check
      _
    $region7: #{tpu_custom_call.1} parent=1 // pred_check_branch
      %29 = sbr.rel (0) target = $region9
    $region8: #{tpu_custom_call.1} parent=1 // pred_region
      _
    $region9: #{tpu_custom_call.1} parent=1 // pred_fallthru
      _
    // Predicated region
    $region10: #{tpu_custom_call.1} parent=1 // pred_check
      _
    $region11: #{tpu_custom_call.1} parent=1 // pred_check_branch
      %31 = sbr.rel (0) target = $region13
    $region12: #{tpu_custom_call.1} parent=1 // pred_region
      %s33 = ssub.s32 512, 512
      %34 = vsyncadd [#allocation6], %s33
      %s35 = sshll.u32 [#allocation5], 4
      %s36 = int_to_ptr.vmem [resolvable:$true] %s35
      %41 = dma.hbm_to_vmem [thread:$0]  %s2, 512, %s36, [#allocation6], 128, 128, 8
    $region13: #{tpu_custom_call.1} parent=1 // pred_fallthru
      _
    // Predicated region
    $region14: #{tpu_custom_call.1} parent=1 // pred_check
      _
    $region15: #{tpu_custom_call.1} parent=1 // pred_check_branch
      %43 = sbr.rel (0) target = $region17
    $region16: #{tpu_custom_call.1} parent=1 // pred_region
      _
    $region17: #{tpu_custom_call.1} parent=1 // pred_fallthru
      _
    // Predicated region
    $region18: #{tpu_custom_call.1} parent=1 // pred_check
      _
    $region19: #{tpu_custom_call.1} parent=1 // pred_check_branch
      %45 = sbr.rel (0) target = $region21
    $region20: #{tpu_custom_call.1} parent=1 // pred_region
      _
    $region21: #{tpu_custom_call.1} parent=1 // pred_fallthru
      _
    // Predicated region
    $region22: #{tpu_custom_call.1} parent=1 // pred_check
      _
    $region23: #{tpu_custom_call.1} parent=1 // pred_check_branch
      %47 = sbr.rel (0) target = $region25
    $region24: #{tpu_custom_call.1} parent=1 // pred_region
      %48 = dma.done [#allocation3], 256
    $region25: #{tpu_custom_call.1} parent=1 // pred_fallthru
      _
    // Predicated region
    $region26: #{tpu_custom_call.1} parent=1 // pred_check
      _
    $region27: #{tpu_custom_call.1} parent=1 // pred_check_branch
      %50 = sbr.rel (0) target = $region29
    $region28: #{tpu_custom_call.1} parent=1 // pred_region
      %51 = dma.done [#allocation6], 512
    $region29: #{tpu_custom_call.1} parent=1 // pred_fallthru
      _
    %v52 = vld [vmem:[#allocation2] sm:$0xff]
    %v53 = vld [vmem:[#allocation2 + $0x8] sm:$0xff]
    %v54 = vld [vmem:[%s1] sm:$0x3]
    %v55 = vld [vmem:[#allocation5] sm:$0xff]
    %v56 = vld [vmem:[#allocation5 + $0x8] sm:$0xff]
    %v57 = vld [vmem:[#allocation5 + $0x10] sm:$0xff]
    %v58 = vld [vmem:[#allocation5 + $0x18] sm:$0xff]
    %v59 = vld [vmem:[%s3] sm:$0x1]
    %v60 = vld [vmem:[%s4] sm:$0x1]
    %v62 = vlaneseq
    %v63 = vshrl.u32 %v62, 7
    %v64 = vsub.s32 0, %v63
    %v65 = vrot.slane %v59, %v64
    %vm67 = vcmask 261120
    %v69 = vsel %vm67, %v52, 0
    %v72 = vsel %vm67, %v53, 0
    %74 = vmatprep.subr.mxu0 0.0
    %75 = vmatpush1.msra.mxu0 %v55
    %76 = vmatprep.subr.mxu0 0.0
    %77 = vmatpush1.msra.mxu0 %v56
    %78 = vmatprep.subr.mxu0 0.0
    %79 = vmatpush1.msra.mxu0 %v57
    %80 = vmatprep.subr.mxu0 0.0
    %81 = vmatpush1.msra.mxu0 %v58
    %82 = vmatprep.subr.mxu0 0.0
    %83 = vmatpush1.msra.mxu0 0.0
    %84 = vmatprep.subr.mxu0 0.0
    %85 = vmatpush1.msra.mxu0 0.0
    %86 = vmatprep.subr.mxu0 0.0
    %87 = vmatpush1.msra.mxu0 0.0
    %88 = vmatprep.subr.mxu0 0.0
    %89 = vmatpush1.msra.mxu0 0.0
    %90 = vmatprep.subr.mxu0 0.0
    %91 = vmatpush1.msra.mxu0 0.0
    %92 = vmatprep.subr.mxu0 0.0
    %93 = vmatpush1.msra.mxu0 0.0
    %94 = vmatprep.subr.mxu0 0.0
    %95 = vmatpush1.msra.mxu0 0.0
    %96 = vmatprep.subr.mxu0 0.0
    %97 = vmatpush1.msra.mxu0 0.0
    %98 = vmatprep.subr.mxu0 0.0
    %99 = vmatpush1.msra.mxu0 0.0
    %100 = vmatprep.subr.mxu0 0.0
    %101 = vmatpush1.msra.mxu0 0.0
    %102 = vmatprep.subr.mxu0 0.0
    %103 = vmatpush1.msra.mxu0 0.0
    %104 = vmatprep.subr.mxu0 0.0
    %105 = vmatpush1.msra.mxu0 0.0
    %106 = vmatprep.subr.mxu0 0.0
    %107 = vmatpush1.msra.mxu0 0.0
    %108 = vmatprep.subr.mxu0 0.0
    %109 = vmatpush1.msra.mxu0 0.0
    %110 = vmatprep.subr.mxu0 0.0
    %111 = vmatpush1.msra.mxu0 0.0
    %112 = vmatprep.subr.mxu0 0.0
    %113 = vmatpush1.msra.mxu0 0.0
    %114 = vmatprep.subr.mxu0 0.0
    %115 = vmatpush1.msra.mxu0 0.0
    %116 = vmatprep.subr.mxu0 0.0
    %117 = vmatpush1.msra.mxu0 0.0
    %118 = vmatprep.subr.mxu0 0.0
    %119 = vmatpush1.msra.mxu0 0.0
    %120 = vmatprep.subr.mxu0 0.0
    %121 = vmatpush1.msra.mxu0 0.0
    %122 = vmatprep.subr.mxu0 0.0
    %123 = vmatpush1.msra.mxu0 0.0
    %124 = vmatprep.subr.mxu0 0.0
    %125 = vmatpush1.msra.mxu0 0.0
    %126 = vmatprep.subr.mxu0 0.0
    %127 = vmatpush1.msra.mxu0 0.0
    %128 = vmatprep.subr.mxu0 0.0
    %129 = vmatpush1.msra.mxu0 0.0
    %130 = vmatprep.subr.mxu0 0.0
    %131 = vmatpush1.msra.mxu0 0.0
    %132 = vmatprep.subr.mxu0 0.0
    %133 = vmatpush1.msra.mxu0 0.0
    %134 = vmatprep.subr.mxu0 0.0
    %135 = vmatpush1.msra.mxu0 0.0
    %136 = vmatprep.subr.mxu0 0.0
    %137 = vmatpush1.msra.mxu0 0.0
    %138 = vmatprep.mubr.f32.mxu0 0.0
    %139 = vmatmul.mubr.f32.gmra.mrb[0].mxu0 %v69
    %v140 = vpop.f32.mrb[0].mxu0
    %v141 = vadd.f32 %v65, %v140
    %v142 = vpop.f32.mrb[0].mxu0
    %143 = vmatprep.mubr.f32.mxu0 0.0
    %144 = vmatmul.mubr.f32.gmra.mrb[0].mxu0 %v72
    %v145 = vpop.f32.mrb[0].mxu0
    %v146 = vadd.f32 %v65, %v145
    %v147 = vpop.f32.mrb[0].mxu0
    %148 = vdwg.mxu0
    %v149 = vtanh.pop %v141
    %v150 = vtanh.pop %v146
    %v152 = vlaneseq
    %v153 = vshrl.u32 %v152, 7
    %v154 = vsub.s32 0, %v153
    %v155 = vrot.slane %v60, %v154
    %v157 = vmul.f32 %v149, %v155
    %v158 = vmul.f32 %v150, %v155
    %vm159 = vcmask 523264
    %v160 = vsel %vm159, %v157, 0.0
    %161 = vadd.xlane.f32.xlu0 %v160
    %v162 = vpop.xlane.xlu0 %161
    %v163 = vsel %vm159, %v158, 0.0
    %164 = vadd.xlane.f32.xlu0 %v163
    %v165 = vpop.xlane.xlu0 %164
    %v166 = vlaneseq
    %v167 = vshrl.u32 %v166, 7
    %v168 = vsub.s32 0, %v167
    %v169 = vrot.slane %v54, %v168
    %171 = vbcast.lane.b32.xlu0 %v169, 256
    %v172 = vpop.permute.xlu0 %171
    %v173 = vlaneseq
    %v174 = vshrl.u32 %v173, 7
    %v175 = vsub.s32 1, %v174
    %v176 = vrot.slane %v54, %v175
    %178 = vbcast.lane.b32.xlu0 %v176, 256
    %v179 = vpop.permute.xlu0 %178
    %vm180 = vcmp.eq.s32.totalorder %v172, 0
    %vm181 = vcmp.eq.s32.totalorder %v179, 0
    %v182 = vsel %vm180, -1e+09, %v162
    %v183 = vsel %vm181, -1e+09, %v165
    %v184 = vrot.slane %v182, 4
    %v185 = vmax.f32 %v182, %v184
    %v186 = vrot.slane %v185, 2
    %v187 = vmax.f32 %v185, %v186
    %v188 = vrot.slane %v187, 1
    %v189 = vmax.f32 %v187, %v188
    %v190 = vrot.slane %v183, 4
    %v191 = vmax.f32 %v183, %v190
    %v192 = vrot.slane %v191, 2
    %v193 = vmax.f32 %v191, %v192
    %v194 = vrot.slane %v193, 1
    %v195 = vmax.f32 %v193, %v194
    %v196 = vsub.f32 %v182, %v189
    %v197 = vsub.f32 %v183, %v195
    %v198 = vmul.f32 %v196, 1.442695
    %v199 = vpow.pop %v198
    %v200 = vmul.f32 %v197, 1.442695
    %v201 = vpow.pop %v200
    %v202 = vrot.slane %v199, 4
    %v203 = vadd.f32 %v199, %v202
    %v204 = vrot.slane %v203, 2
    %v205 = vadd.f32 %v203, %v204
    %v206 = vrot.slane %v205, 1
    %v207 = vadd.f32 %v205, %v206
    %v208 = vrot.slane %v201, 4
    %v209 = vadd.f32 %v201, %v208
    %v210 = vrot.slane %v209, 2
    %v211 = vadd.f32 %v209, %v210
    %v212 = vrot.slane %v211, 1
    %v213 = vadd.f32 %v211, %v212
    %v214 = vrcp.pop %v207
    %v215 = vmul.f32 %v199, %v214
    %v216 = vrcp.pop %v213
    %v217 = vmul.f32 %v201, %v216
    %v218 = vmul.f32 %v52, %v215
    %v219 = vmul.f32 %v53, %v217
    %v220 = vsel %vm67, %v218, 0.0
    %v221 = vrot.slane %v220, 4
    %v222 = vadd.f32 %v220, %v221
    %v223 = vrot.slane %v222, 2
    %v224 = vadd.f32 %v222, %v223
    %v225 = vrot.slane %v224, 1
    %v226 = vadd.f32 %v224, %v225
    %v227 = vsel %vm67, %v219, 0.0
    %v228 = vrot.slane %v227, 4
    %v229 = vadd.f32 %v227, %v228
    %v230 = vrot.slane %v229, 2
    %v231 = vadd.f32 %v229, %v230
    %v232 = vrot.slane %v231, 1
    %v233 = vadd.f32 %v231, %v232
    %vm236 = vcmask 1041409
    %v237 = vsel %vm236, %v233, %v226
    %vm239 = vcmask 254976
    %240 = vst.msk [vmem:[#allocation7] sm:$0x3] %vm239, %v237
    %v243 = vlaneseq
    %v244 = vand.u32 %v243, 127
    %v245 = vlaneseq
    %v246 = vshrl.u32 %v245, 7
    %v247 = vsub.s32 %v244, %v246
    %v248 = vrot.slane %v215, %v247
    %v249 = vlaneseq
    %v250 = vshrl.u32 %v249, 7
    %v251 = vsub.s32 %v244, %v250
    %v252 = vrot.slane %v217, %v251
    %v253 = vsel %vm236, %v252, %v248
    %vm255 = vcmask 58368
    %256 = vst.msk [vmem:[#allocation8] sm:$0x3] %vm255, %v253
    // Predicated region
    $region30: #{tpu_custom_call.1} parent=1 // pred_check
      _
    $region31: #{tpu_custom_call.1} parent=1 // pred_check_branch
      %258 = sbr.rel (0) target = $region33
    $region32: #{tpu_custom_call.1} parent=1 // pred_region
      %s260 = ssub.s32 32, 32
      %261 = vsyncadd [#allocation4], %s260
      %s263 = sshll.u32 [#allocation7], 4
      %s264 = int_to_ptr.vmem [resolvable:$true] %s263
      %266 = dma.vmem_to_hbm [thread:$0]  %s264, 32, %s5, [#allocation4]
    $region33: #{tpu_custom_call.1} parent=1 // pred_fallthru
      _
    // Predicated region
    $region34: #{tpu_custom_call.1} parent=1 // pred_check
      _
    $region35: #{tpu_custom_call.1} parent=1 // pred_check_branch
      %268 = sbr.rel (0) target = $region37
    $region36: #{tpu_custom_call.1} parent=1 // pred_region
      %s270 = ssub.s32 32, 32
      %271 = vsyncadd [#allocation9], %s270
      %s273 = sshll.u32 [#allocation8], 4
      %s274 = int_to_ptr.vmem [resolvable:$true] %s273
      %276 = dma.vmem_to_hbm [thread:$0]  %s274, 32, %s6, [#allocation9]
    $region37: #{tpu_custom_call.1} parent=1 // pred_fallthru
      _
    // Predicated region
    $region38: #{tpu_custom_call.1} parent=1 // pred_check
      _
    $region39: #{tpu_custom_call.1} parent=1 // pred_check_branch
      %278 = sbr.rel (0) target = $region41
    $region40: #{tpu_custom_call.1} parent=1 // pred_region
      %279 = dma.done [#allocation4], 32
    $region41: #{tpu_custom_call.1} parent=1 // pred_fallthru
      _
    // Predicated region
    $region42: #{tpu_custom_call.1} parent=1 // pred_check
      _
    $region43: #{tpu_custom_call.1} parent=1 // pred_check_branch
      %281 = sbr.rel (0) target = $region45
    $region44: #{tpu_custom_call.1} parent=1 // pred_region
      %282 = dma.done [#allocation9], 32
    $region45: #{tpu_custom_call.1} parent=1 // pred_fallthru
      _
    %283 = vsyncpa [#allocation3], 1
    %284 = vsyncpa [#allocation6], 1
    %285 = vsyncpa [#allocation4], 1
    %286 = vsyncpa [#allocation9], 1

</llo_original>
